<compile_context>
chip_gen: v7x
topology: tpu7x:2x2x1
jax: 0.10.0
libtpu: 0.0.40
codegen_flags: <defaults>
</compile_context>

<pallas_src>
import functools

import jax
import jax.numpy as jnp
from jax.experimental import pallas as pl
from jax.experimental.pallas import tpu as pltpu


def _round_up(x, m):
    return ((x + m - 1) // m) * m


def _cdiv(a, b):
    return (a + b - 1) // b


def se_kernel(x_ref, w1_ref, b1_ref, w2_ref, b2_ref, o_ref, acc_ref,
              *, hw, tile_s, lane_p, ragged):
    k = pl.program_id(1)

    @pl.when(k == 0)
    def _():
        acc_ref[...] = jnp.zeros_like(acc_ref)

    # x block: (tile_n, C, tile_s) in its native dtype; cast to f32 in-vreg.
    x = x_ref[...].astype(jnp.float32)

    if ragged:
        # Only emitted when HW % tile_s != 0: zero out-of-range spatial
        # positions of the last (padded) block.  Pure VPU work, hidden under
        # the HBM stream.
        s_idx = jax.lax.broadcasted_iota(jnp.int32, x.shape, 2)
        x = jnp.where(k * tile_s + s_idx < hw, x, 0.0)

    # Lane-partial accumulation: fold aligned lane_p-wide chunks with pure
    # element-wise vreg adds (no cross-lane / cross-sublane movement here).
    part = x[:, :, 0:lane_p]
    for j in range(1, tile_s // lane_p):
        part = part + x[:, :, j * lane_p:(j + 1) * lane_p]
    acc_ref[...] += part

    # Epilogue only on the last spatial tile.
    @pl.when(k == pl.num_programs(1) - 1)
    def _():
        # Single cross-lane reduce of the lane partials -> pooled (tile_n, C).
        pooled = jnp.sum(acc_ref[...], axis=-1)
        # 1x1 convs on the pooled vector are plain channel matmuls; the
        # 1/(H*W) mean scale is already folded into w1.
        h = jnp.dot(pooled, w1_ref[...],
                    preferred_element_type=jnp.float32) + b1_ref[...]
        h = jnp.maximum(h, 0.0)                                   # ReLU
        y = jnp.dot(h, w2_ref[...],
                    preferred_element_type=jnp.float32) + b2_ref[...]
        # HardSigmoid: relu6(y + 3) / 6
        y = jnp.clip(y + 3.0, 0.0, 6.0) * (1.0 / 6.0)
        o_ref[...] = y[:, None, :].astype(o_ref.dtype)


def squeeze_and_expand(x_nchw, w1, b1, w2, b2, *, tile_n=None, tile_s=None,
                       block_budget_bytes=2 * 1024 * 1024):
    """x_nchw: (N, C, H, W); w1: (hidden, C, 1, 1); w2: (planes, hidden, 1, 1)."""
    N, C, H, W = x_nchw.shape
    hidden = w1.shape[0]
    planes = w2.shape[0]
    HW = H * W
    itemsize = x_nchw.dtype.itemsize

    # Native NCHW layout, spatial collapsed onto lanes.  This reshape is a
    # free view -> no extra HBM pass before the kernel.
    x = x_nchw.reshape(N, C, HW)

    # ---- tile selection --------------------------------------------------
    # Batch tile: keep >= 2 batch grid steps when N >= 2 (v7x: only the
    # 'parallel' axis is sharded across the two TensorCores), cap the rows,
    # and keep even a minimal 128-lane block within the byte budget.
    if tile_n is None:
        budget_rows = max(1, block_budget_bytes // (C * 128 * itemsize))
        tile_n = max(1, min(N // 2 if N >= 2 else 1, 32, budget_rows))
    tile_n = max(1, min(tile_n, N))

    # Spatial tile: multiple of 128 (lane-dense), never larger than HW, sized
    # toward the byte budget and balanced so the ragged tail waste is small.
    if tile_s is None:
        if HW >= 128:
            cap = max(128,
                      (block_budget_bytes // (tile_n * C * itemsize)) // 128 * 128)
            base = max(128, min(cap, (HW // 128) * 128))
            n_s = _cdiv(HW, base)
            tile_s = max(128, min(base, _round_up(_cdiv(HW, n_s), 128)))
        else:
            tile_s = HW
    lane_p = 128 if tile_s % 128 == 0 else tile_s
    ragged = (HW % tile_s) != 0

    planes_pad = _round_up(planes, 128)

    # ---- weights: fold the mean scale, transpose, lane-pad ---------------
    inv_hw = 1.0 / float(HW)
    w1_t = w1.reshape(hidden, C).T.astype(jnp.float32) * inv_hw       # (C, hidden)
    b1_r = b1.reshape(1, hidden).astype(jnp.float32)
    w2_t = w2.reshape(planes, hidden).T.astype(jnp.float32)           # (hidden, planes)
    b2_r = b2.reshape(1, planes).astype(jnp.float32)
    if planes_pad != planes:
        w2_t = jnp.pad(w2_t, ((0, 0), (0, planes_pad - planes)))
        b2_r = jnp.pad(b2_r, ((0, 0), (0, planes_pad - planes)))

    grid = (_cdiv(N, tile_n), _cdiv(HW, tile_s))

    # ---- VMEM budget (derived, v7x-safe) ----------------------------------
    x_block_bytes = tile_n * C * tile_s * itemsize
    out_block_bytes = tile_n * planes_pad * 4
    acc_bytes = tile_n * C * lane_p * 4
    weight_bytes = int((w1_t.size + b1_r.size + w2_t.size + b2_r.size) * 4)
    vmem_needed = 2 * x_block_bytes + 2 * out_block_bytes + acc_bytes + 2 * weight_bytes
    vmem_limit = int(min(48 * 1024 * 1024, max(16 * 1024 * 1024, 2 * vmem_needed)))

    cost = pl.CostEstimate(
        flops=int(N * HW * C                         # pooling adds
                  + 2 * N * C * hidden               # first 1x1 conv
                  + 2 * N * hidden * planes_pad),    # second 1x1 conv
        transcendentals=0,
        bytes_accessed=int(x.size * itemsize + weight_bytes + N * planes_pad * 4),
    )

    kernel = functools.partial(se_kernel, hw=HW, tile_s=tile_s,
                               lane_p=lane_p, ragged=ragged)

    out = pl.pallas_call(
        kernel,
        out_shape=jax.ShapeDtypeStruct((N, 1, planes_pad), jnp.float32),
        grid_spec=pltpu.PrefetchScalarGridSpec(
            num_scalar_prefetch=0,
            grid=grid,
            in_specs=[
                # activation: tiled over (batch, spatial); C whole on sublanes,
                # spatial on lanes (native NCHW layout, lane-dense).
                pl.BlockSpec((tile_n, C, tile_s), lambda i, k: (i, 0, k)),
                # weights/biases: small, VMEM-resident across the grid.
                pl.BlockSpec((C, hidden), lambda i, k: (0, 0)),
                pl.BlockSpec((1, hidden), lambda i, k: (0, 0)),
                pl.BlockSpec((hidden, planes_pad), lambda i, k: (0, 0)),
                pl.BlockSpec((1, planes_pad), lambda i, k: (0, 0)),
            ],
            out_specs=pl.BlockSpec((tile_n, 1, planes_pad),
                                   lambda i, k: (i, 0, 0)),
            scratch_shapes=[pltpu.VMEM((tile_n, C, lane_p), jnp.float32)],
        ),
        compiler_params=pltpu.CompilerParams(
            dimension_semantics=("parallel", "arbitrary"),
            vmem_limit_bytes=vmem_limit,
        ),
        cost_estimate=cost,
    )(x, w1_t, b1_r, w2_t, b2_r)

    return out[:, 0, :planes].reshape(N, planes, 1, 1)


def reference(x_nchw, w1, b1, w2, b2):
    """Pure-JAX reference mirroring the PyTorch module."""
    hidden = w1.shape[0]
    planes = w2.shape[0]
    pooled = jnp.mean(x_nchw.astype(jnp.float32), axis=(2, 3))           # (N, C)
    h = pooled @ w1.reshape(hidden, -1).T + b1
    h = jnp.maximum(h, 0.0)
    y = h @ w2.reshape(planes, hidden).T + b2
    y = jnp.clip(y + 3.0, 0.0, 6.0) / 6.0
    return y.reshape(*y.shape, 1, 1)


if __name__ == "__main__":
    # Module hyperparameters (small, consistent with ratio=8)
    N, C, H, W = 2, 32, 16, 16
    ratio = 8
    hidden = C // ratio          # 4
    planes = C                   # 32

    key = jax.random.PRNGKey(0)
    kx, kw1, kb1, kw2, kb2 = jax.random.split(key, 5)

    x = jax.random.normal(kx, (N, C, H, W), dtype=jnp.float32)
    # Conv2d weight shape: (out, in, 1, 1)
    w1 = jax.random.normal(kw1, (hidden, C, 1, 1), dtype=jnp.float32) * 0.1
    b1 = jax.random.normal(kb1, (hidden,), dtype=jnp.float32) * 0.1
    w2 = jax.random.normal(kw2, (planes, hidden, 1, 1), dtype=jnp.float32) * 0.1
    b2 = jax.random.normal(kb2, (planes,), dtype=jnp.float32) * 0.1

    out = squeeze_and_expand(x, w1, b1, w2, b2)
    out = jax.block_until_ready(out)

    ref = reference(x, w1, b1, w2, b2)
    assert out.shape == (N, planes, 1, 1)
    assert jnp.allclose(out, ref, atol=1e-5, rtol=1e-5), (
        float(jnp.max(jnp.abs(out - ref))))

    print("KERNEL_OK")
</pallas_src>

<mosaic_0001>
module attributes {stable_mosaic.version = 11 : i64} {
  func.func @se_kernel(%arg0: i32, %arg1: i32, %arg2: memref<1x32x256xf32, #tpu.memory_space<vmem>>, %arg3: memref<32x4xf32, #tpu.memory_space<vmem>>, %arg4: memref<1x4xf32, #tpu.memory_space<vmem>>, %arg5: memref<4x128xf32, #tpu.memory_space<vmem>>, %arg6: memref<1x128xf32, #tpu.memory_space<vmem>>, %arg7: memref<1x1x128xf32, #tpu.memory_space<vmem>>, %arg8: memref<1x32x128xf32, #tpu.memory_space<vmem>>) attributes {dimension_semantics = [#tpu.dimension_semantics<parallel>, #tpu.dimension_semantics<arbitrary>], iteration_bounds = array<i64: 2, 1>, scalar_prefetch = 0 : i64, scratch_operands = 1 : i64, tpu.core_type = #tpu.core_type<tc>, window_params = [{transform_indices = @transform_0, window_bounds = array<i64: 1, 32, 256>}, {pipeline_mode = #tpu.pipeline_mode<synchronous>, transform_indices = @transform_1, window_bounds = array<i64: 32, 4>}, {pipeline_mode = #tpu.pipeline_mode<synchronous>, transform_indices = @transform_2, window_bounds = array<i64: 1, 4>}, {pipeline_mode = #tpu.pipeline_mode<synchronous>, transform_indices = @transform_3, window_bounds = array<i64: 4, 128>}, {pipeline_mode = #tpu.pipeline_mode<synchronous>, transform_indices = @transform_4, window_bounds = array<i64: 1, 128>}, {transform_indices = @transform_5, window_bounds = array<i64: 1, 1, 128>}]} {
    %c0_i32 = arith.constant 0 : i32
    %0 = arith.cmpi eq, %arg1, %c0_i32 : i32
    %1 = arith.extui %0 : i1 to i32
    %c0_i32_0 = arith.constant 0 : i32
    %2 = arith.cmpi ne, %1, %c0_i32_0 : i32
    scf.if %2 {
      %cst = arith.constant 0.000000e+00 : f32
      %13 = vector.broadcast %cst : f32 to vector<1x32x128xf32>
      %c0_11 = arith.constant 0 : index
      %c0_12 = arith.constant 0 : index
      %c0_13 = arith.constant 0 : index
      %14 = vector.load %arg8[%c0_11, %c0_12, %c0_13] : memref<1x32x128xf32, #tpu.memory_space<vmem>>, vector<1x32x128xf32>
      tpu.vector_store %arg8[%c0_11, %c0_12, %c0_13], %13 {strides = array<i32>} : memref<1x32x128xf32, #tpu.memory_space<vmem>>, vector<1x32x128xf32>,
    } else {
    }
    %c0 = arith.constant 0 : index
    %c0_1 = arith.constant 0 : index
    %c0_2 = arith.constant 0 : index
    %3 = vector.load %arg2[%c0, %c0_1, %c0_2] : memref<1x32x256xf32, #tpu.memory_space<vmem>>, vector<1x32x256xf32>
    %4 = vector.extract_strided_slice %3 {offsets = [0, 0, 0], sizes = [1, 32, 128], strides = [1, 1, 1]} : vector<1x32x256xf32> to vector<1x32x128xf32>
    %5 = vector.extract_strided_slice %3 {offsets = [0, 0, 128], sizes = [1, 32, 128], strides = [1, 1, 1]} : vector<1x32x256xf32> to vector<1x32x128xf32>
    %6 = arith.addf %4, %5 : vector<1x32x128xf32>
    %c0_3 = arith.constant 0 : index
    %c0_4 = arith.constant 0 : index
    %c0_5 = arith.constant 0 : index
    %7 = vector.load %arg8[%c0_3, %c0_4, %c0_5] : memref<1x32x128xf32, #tpu.memory_space<vmem>>, vector<1x32x128xf32>
    %8 = arith.addf %7, %6 : vector<1x32x128xf32>
    %c0_6 = arith.constant 0 : index
    %c0_7 = arith.constant 0 : index
    %c0_8 = arith.constant 0 : index
    %9 = vector.load %arg8[%c0_6, %c0_7, %c0_8] : memref<1x32x128xf32, #tpu.memory_space<vmem>>, vector<1x32x128xf32>
    tpu.vector_store %arg8[%c0_6, %c0_7, %c0_8], %8 {strides = array<i32>} : memref<1x32x128xf32, #tpu.memory_space<vmem>>, vector<1x32x128xf32>,
    %c0_i32_9 = arith.constant 0 : i32
    %10 = arith.cmpi eq, %arg1, %c0_i32_9 : i32
    %11 = arith.extui %10 : i1 to i32
    %c0_i32_10 = arith.constant 0 : i32
    %12 = arith.cmpi ne, %11, %c0_i32_10 : i32
    scf.if %12 {
      %c0_11 = arith.constant 0 : index
      %c0_12 = arith.constant 0 : index
      %c0_13 = arith.constant 0 : index
      %13 = vector.load %arg8[%c0_11, %c0_12, %c0_13] : memref<1x32x128xf32, #tpu.memory_space<vmem>>, vector<1x32x128xf32>
      %cst = arith.constant dense<0.000000e+00> : vector<1x32xf32>
      %14 = vector.multi_reduction <add>, %13, %cst [2] : vector<1x32x128xf32> to vector<1x32xf32>
      %c0_14 = arith.constant 0 : index
      %c0_15 = arith.constant 0 : index
      %15 = vector.load %arg3[%c0_14, %c0_15] : memref<32x4xf32, #tpu.memory_space<vmem>>, vector<32x4xf32>
      %cst_16 = arith.constant dense<0.000000e+00> : vector<1x4xf32>
      %16 = tpu.matmul %14, %15, %cst_16 {dimension_numbers = #tpu.dot_dimension_numbers<[1], [0], [0], [1], [0, 0, 1, 1], [], []>} : vector<1x32xf32>, vector<32x4xf32>, vector<1x4xf32> -> vector<1x4xf32>
      %c0_17 = arith.constant 0 : index
      %c0_18 = arith.constant 0 : index
      %17 = vector.load %arg4[%c0_17, %c0_18] : memref<1x4xf32, #tpu.memory_space<vmem>>, vector<1x4xf32>
      %18 = arith.addf %16, %17 : vector<1x4xf32>
      %cst_19 = arith.constant 0.000000e+00 : f32
      %19 = vector.broadcast %cst_19 : f32 to vector<1x4xf32>
      %20 = arith.maximumf %18, %19 : vector<1x4xf32>
      %c0_20 = arith.constant 0 : index
      %c0_21 = arith.constant 0 : index
      %21 = vector.load %arg5[%c0_20, %c0_21] : memref<4x128xf32, #tpu.memory_space<vmem>>, vector<4x128xf32>
      %cst_22 = arith.constant dense<0.000000e+00> : vector<1x128xf32>
      %22 = tpu.matmul %20, %21, %cst_22 {dimension_numbers = #tpu.dot_dimension_numbers<[1], [0], [0], [1], [0, 0, 1, 1], [], []>} : vector<1x4xf32>, vector<4x128xf32>, vector<1x128xf32> -> vector<1x128xf32>
      %c0_23 = arith.constant 0 : index
      %c0_24 = arith.constant 0 : index
      %23 = vector.load %arg6[%c0_23, %c0_24] : memref<1x128xf32, #tpu.memory_space<vmem>>, vector<1x128xf32>
      %24 = arith.addf %22, %23 : vector<1x128xf32>
      %cst_25 = arith.constant 3.000000e+00 : f32
      %25 = vector.broadcast %cst_25 : f32 to vector<1x128xf32>
      %26 = arith.addf %24, %25 : vector<1x128xf32>
      %cst_26 = arith.constant 0.000000e+00 : f32
      %cst_27 = arith.constant 6.000000e+00 : f32
      %27 = vector.broadcast %cst_26 : f32 to vector<1x128xf32>
      %28 = arith.maximumf %27, %26 : vector<1x128xf32>
      %29 = vector.broadcast %cst_27 : f32 to vector<1x128xf32>
      %30 = arith.minimumf %29, %28 : vector<1x128xf32>
      %cst_28 = arith.constant 0.166666672 : f32
      %31 = vector.broadcast %cst_28 : f32 to vector<1x128xf32>
      %32 = arith.mulf %30, %31 : vector<1x128xf32>
      %33 = vector.shape_cast %32 : vector<1x128xf32> to vector<1x1x128xf32>
      %c0_29 = arith.constant 0 : index
      %c0_30 = arith.constant 0 : index
      %c0_31 = arith.constant 0 : index
      %34 = vector.load %arg7[%c0_29, %c0_30, %c0_31] : memref<1x1x128xf32, #tpu.memory_space<vmem>>, vector<1x1x128xf32>
      tpu.vector_store %arg7[%c0_29, %c0_30, %c0_31], %33 {strides = array<i32>} : memref<1x1x128xf32, #tpu.memory_space<vmem>>, vector<1x1x128xf32>,
    } else {
    }
    return
  }
  func.func @transform_0(%arg0: i32, %arg1: i32) -> (i32, i32, i32) {
    %c0_i32 = arith.constant 0 : i32
    %c0_i32_0 = arith.constant 0 : i32
    return %arg0, %c0_i32, %arg1 : i32, i32, i32
  }
  func.func @transform_1(%arg0: i32, %arg1: i32) -> (i32, i32) {
    %c0_i32 = arith.constant 0 : i32
    %c0_i32_0 = arith.constant 0 : i32
    %c0_i32_1 = arith.constant 0 : i32
    return %c0_i32, %c0_i32_0 : i32, i32
  }
  func.func @transform_2(%arg0: i32, %arg1: i32) -> (i32, i32) {
    %c0_i32 = arith.constant 0 : i32
    %c0_i32_0 = arith.constant 0 : i32
    %c0_i32_1 = arith.constant 0 : i32
    return %c0_i32, %c0_i32_0 : i32, i32
  }
  func.func @transform_3(%arg0: i32, %arg1: i32) -> (i32, i32) {
    %c0_i32 = arith.constant 0 : i32
    %c0_i32_0 = arith.constant 0 : i32
    %c0_i32_1 = arith.constant 0 : i32
    return %c0_i32, %c0_i32_0 : i32, i32
  }
  func.func @transform_4(%arg0: i32, %arg1: i32) -> (i32, i32) {
    %c0_i32 = arith.constant 0 : i32
    %c0_i32_0 = arith.constant 0 : i32
    %c0_i32_1 = arith.constant 0 : i32
    return %c0_i32, %c0_i32_0 : i32, i32
  }
  func.func @transform_5(%arg0: i32, %arg1: i32) -> (i32, i32, i32) {
    %c0_i32 = arith.constant 0 : i32
    %c0_i32_0 = arith.constant 0 : i32
    %c0_i32_1 = arith.constant 0 : i32
    return %arg0, %c0_i32, %c0_i32_0 : i32, i32, i32
  }
}

</mosaic_0001>

<llo_original>
// kernel: tpu_custom_call.1
$region0: #{tpu_custom_call.1}
  #allocation0 [shape = 'u32[]', space=smem, size = 0x4, offset = 0x4, fixed_abs, tag = 'smem constant byte address 0x4 - core index']
  #allocation1 [shape = 'u32[144,128]{1,0:T(1,128)}', space=vmem, size = 0x12000, scoped, tag = 'internal scratch']
  #allocation2 [shape = 'f32[1,32,128]{2,1,0:T(8,128)}', space=vmem, size = 0x4000, scoped, tag = 'scratch operand']
  %s0 = inlined_call_operand.hbm [shape: f32[2,32,256], index: 0, kind: input, shape index: {}]
  %s1 = inlined_call_operand.vmem [shape: f32[32,4], index: 1, kind: input, shape index: {}]
  %s2 = inlined_call_operand.vmem [shape: f32[1,4], index: 2, kind: input, shape index: {}]
  %s3 = inlined_call_operand.vmem [shape: f32[4,128], index: 3, kind: input, shape index: {}]
  %s4 = inlined_call_operand.vmem [shape: f32[1,128], index: 4, kind: input, shape index: {}]
  %s5 = inlined_call_operand.hbm [shape: f32[2,1,128], index: 5, kind: output, shape index: {}]
  %s6 = sld [smem:[#allocation0]]
  $region65: #{tpu_custom_call.1} parent=0
    _
  %s8 = ssub.s32 1, %s6
  %s9 = scalar_select 0, %s8, %s6
  $region1: #{tpu_custom_call.1} parent=0
    #allocation3 [shape = 'u8[65536]{0}', space=vmem, size = 0x10000, scoped, tag = 'input window, operand 0']
    #allocation4 [shape = 's32[2]{0}', space=sflag, size = 0x8, scoped, tag = 'scoped memory for tpu_custom_call.1']
    #allocation5 [shape = 's32[2]{0}', space=sflag, size = 0x8, scoped, tag = 'scoped memory for tpu_custom_call.1']
    #allocation6 [shape = 'u8[1024]{0}', space=vmem, size = 0x400, scoped, tag = 'output window, operand 0']
    %10 = vsyncpa [#allocation4], 0
    %s11 = scalar_lea.sflag [#allocation4], 1
    %12 = vsyncpa %s11, 0
    %13 = vsyncpa [#allocation5], 0
    %s14 = scalar_lea.sflag [#allocation5], 1
    %15 = vsyncpa %s14, 0
    loop: start=0, step=1, limit=4
    $region2: #{tpu_custom_call.1} parent=1 // loop_pre_header
      _
    $region3: #{tpu_custom_call.1} parent=1 // loop_header
      %s17 = sphi 0, %s21
      %p18 = scmp.ge.s32.totalorder %s17, 4
      %s24 = sphi 0, %s36
      %s25 = sphi 0, %s32
      %s26 = sphi 0, %s24
      %s27 = sphi 0, %s25
      %s28 = sphi 0, %s26
      %s29 = sphi 0, %s27
      %s41 = sphi 0, %s43
      %s44 = sphi 0, %s41
      %s45 = sphi 0, %s44
      %s61 = sphi 0, %s45
      %s65 = sphi 0, %s65
      %s67 = sphi 0, %s65
      %s68 = sphi 0, %s67
      %s82 = sphi 0, %s68
      %s86 = sphi 0, %s86
      %s88 = sphi 0, %s86
      %s89 = sphi 0, %s88
      %s103 = sphi 0, %s89
      %s107 = sphi 0, %s107
      %s109 = sphi 0, %s107
      %s110 = sphi 0, %s109
      %s124 = sphi 0, %s110
      %s128 = sphi 0, %s128
      %s130 = sphi 0, %s128
      %s131 = sphi 0, %s130
      %s145 = sphi 0, %s131
      %s151 = sphi 0, %s153
      %s154 = sphi 0, %s151
      %s155 = sphi 0, %s154
      %s171 = sphi 0, %s155
    $region4: #{tpu_custom_call.1} parent=1 // loop_header_branch
      %20 = sbr.rel (%p18) target = $region8
    $region5: #{tpu_custom_call.1} parent=1 // loop_body
      %s22 = ssub.s32 %s17, 1
      %s23 = ssub.s32 %s17, 2
      %s30 = sadd.s32 1, %s25
      %p31 = scmp.ge.s32.totalorder %s30, 1
      %s32 = scalar_select %p31, 0, %s30
      %s33 = sadd.s32 1, %s24
      %s34 = scalar_select %p31, %s33, %s24
      %p35 = scmp.ge.s32.totalorder %s34, 2
      %s36 = scalar_select %p35, 0, %s34
      %s37 = ssub.s32 %s24, %s36
      %s38 = ssub.s32 %s25, %s32
      %s39 = sor.u32 %s37, %s38
      %p40 = scmp.eq.s32.totalorder %s39, 0
      %s42 = sadd.s32 %s41, 1
      %s43 = scalar_select %p40, %s41, %s42
      %p46 = pneg %p40
      %p47 = scmp.eq.s32.totalorder %s17, 1
      %p48 = por %p46, %p47
      %p49 = scmp.ne.s32.totalorder %s41, %s44
      %p50 = scmp.eq.s32.totalorder %s17, 0
      %p51 = por %p49, %p50
      %p52 = scmp.ne.s32.totalorder %s41, %s44
      %p53 = scmp.eq.s32.totalorder %s22, 1
      %p54 = por %p52, %p53
      %p55 = scmp.ne.s32.totalorder %s44, %s45
      %p56 = scmp.eq.s32.totalorder %s22, 0
      %p57 = por %p55, %p56
      %p58 = scmp.ne.s32.totalorder %s44, %s45
      %p59 = scmp.eq.s32.totalorder %s23, 1
      %p60 = por %p58, %p59
      %p62 = scmp.ne.s32.totalorder %s45, %s61
      %p63 = scmp.eq.s32.totalorder %s23, 0
      %p64 = por %p62, %p63
      %s66 = sadd.s32 %s65, 1
      %p69 = scmp.eq.s32.totalorder %s17, 1
      %p70 = scmp.ne.s32.totalorder %s65, %s67
      %p71 = scmp.eq.s32.totalorder %s17, 0
      %p72 = por %p70, %p71
      %p73 = scmp.ne.s32.totalorder %s65, %s67
      %p74 = scmp.eq.s32.totalorder %s22, 1
      %p75 = por %p73, %p74
      %p76 = scmp.ne.s32.totalorder %s67, %s68
      %p77 = scmp.eq.s32.totalorder %s22, 0
      %p78 = por %p76, %p77
      %p79 = scmp.ne.s32.totalorder %s67, %s68
      %p80 = scmp.eq.s32.totalorder %s23, 1
      %p81 = por %p79, %p80
      %p83 = scmp.ne.s32.totalorder %s68, %s82
      %p84 = scmp.eq.s32.totalorder %s23, 0
      %p85 = por %p83, %p84
      %s87 = sadd.s32 %s86, 1
      %p90 = scmp.eq.s32.totalorder %s17, 1
      %p91 = scmp.ne.s32.totalorder %s86, %s88
      %p92 = scmp.eq.s32.totalorder %s17, 0
      %p93 = por %p91, %p92
      %p94 = scmp.ne.s32.totalorder %s86, %s88
      %p95 = scmp.eq.s32.totalorder %s22, 1
      %p96 = por %p94, %p95
      %p97 = scmp.ne.s32.totalorder %s88, %s89
      %p98 = scmp.eq.s32.totalorder %s22, 0
      %p99 = por %p97, %p98
      %p100 = scmp.ne.s32.totalorder %s88, %s89
      %p101 = scmp.eq.s32.totalorder %s23, 1
      %p102 = por %p100, %p101
      %p104 = scmp.ne.s32.totalorder %s89, %s103
      %p105 = scmp.eq.s32.totalorder %s23, 0
      %p106 = por %p104, %p105
      %s108 = sadd.s32 %s107, 1
      %p111 = scmp.eq.s32.totalorder %s17, 1
      %p112 = scmp.ne.s32.totalorder %s107, %s109
      %p113 = scmp.eq.s32.totalorder %s17, 0
      %p114 = por %p112, %p113
      %p115 = scmp.ne.s32.totalorder %s107, %s109
      %p116 = scmp.eq.s32.totalorder %s22, 1
      %p117 = por %p115, %p116
      %p118 = scmp.ne.s32.totalorder %s109, %s110
      %p119 = scmp.eq.s32.totalorder %s22, 0
      %p120 = por %p118, %p119
      %p121 = scmp.ne.s32.totalorder %s109, %s110
      %p122 = scmp.eq.s32.totalorder %s23, 1
      %p123 = por %p121, %p122
      %p125 = scmp.ne.s32.totalorder %s110, %s124
      %p126 = scmp.eq.s32.totalorder %s23, 0
      %p127 = por %p125, %p126
      %s129 = sadd.s32 %s128, 1
      %p132 = scmp.eq.s32.totalorder %s17, 1
      %p133 = scmp.ne.s32.totalorder %s128, %s130
      %p134 = scmp.eq.s32.totalorder %s17, 0
      %p135 = por %p133, %p134
      %p136 = scmp.ne.s32.totalorder %s128, %s130
      %p137 = scmp.eq.s32.totalorder %s22, 1
      %p138 = por %p136, %p137
      %p139 = scmp.ne.s32.totalorder %s130, %s131
      %p140 = scmp.eq.s32.totalorder %s22, 0
      %p141 = por %p139, %p140
      %p142 = scmp.ne.s32.totalorder %s130, %s131
      %p143 = scmp.eq.s32.totalorder %s23, 1
      %p144 = por %p142, %p143
      %p146 = scmp.ne.s32.totalorder %s131, %s145
      %p147 = scmp.eq.s32.totalorder %s23, 0
      %p148 = por %p146, %p147
      %s149 = ssub.s32 %s24, %s36
      %p150 = scmp.eq.s32.totalorder %s149, 0
      %s152 = sadd.s32 %s151, 1
      %s153 = scalar_select %p150, %s151, %s152
      %p156 = pneg %p150
      %p157 = scmp.eq.s32.totalorder %s17, 1
      %p158 = por %p156, %p157
      %p159 = scmp.ne.s32.totalorder %s151, %s154
      %p160 = scmp.eq.s32.totalorder %s17, 0
      %p161 = por %p159, %p160
      %p162 = scmp.ne.s32.totalorder %s151, %s154
      %p163 = scmp.eq.s32.totalorder %s22, 1
      %p164 = por %p162, %p163
      %p165 = scmp.ne.s32.totalorder %s154, %s155
      %p166 = scmp.eq.s32.totalorder %s22, 0
      %p167 = por %p165, %p166
      %p168 = scmp.ne.s32.totalorder %s154, %s155
      %p169 = scmp.eq.s32.totalorder %s23, 1
      %p170 = por %p168, %p169
      %p172 = scmp.ne.s32.totalorder %s155, %s171
      %p173 = scmp.eq.s32.totalorder %s23, 0
      %p174 = por %p172, %p173
      %p175 = scmp.le.s32.totalorder 1, %s17
      %p176 = scmp.lt.s32.totalorder %s17, 3
      %p177 = pnand %p175, %p176
      %p178 = pneg %p177
      // Predicated region
      $region9: #{tpu_custom_call.1} parent=5 // pred_check
        _
      $region10: #{tpu_custom_call.1} parent=5 // pred_check_branch
        %180 = sbr.rel (%p177) target = $region12
      $region11: #{tpu_custom_call.1} parent=5 // pred_region
        %s181 = ssub.s32 %s17, 1
        // Predicated region
        $region13: #{tpu_custom_call.1} parent=11 // pred_check
          %p182 = pneg %p78
        $region14: #{tpu_custom_call.1} parent=11 // pred_check_branch
          %184 = sbr.rel (%p182) target = $region16
        $region15: #{tpu_custom_call.1} parent=11 // pred_region
          _
        $region16: #{tpu_custom_call.1} parent=11 // pred_fallthru
          _
        // Predicated region
        $region17: #{tpu_custom_call.1} parent=11 // pred_check
          %p185 = pneg %p99
        $region18: #{tpu_custom_call.1} parent=11 // pred_check_branch
          %187 = sbr.rel (%p185) target = $region20
        $region19: #{tpu_custom_call.1} parent=11 // pred_region
          _
        $region20: #{tpu_custom_call.1} parent=11 // pred_fallthru
          _
        // Predicated region
        $region21: #{tpu_custom_call.1} parent=11 // pred_check
          %p188 = pneg %p120
        $region22: #{tpu_custom_call.1} parent=11 // pred_check_branch
          %190 = sbr.rel (%p188) target = $region24
        $region23: #{tpu_custom_call.1} parent=11 // pred_region
          _
        $region24: #{tpu_custom_call.1} parent=11 // pred_fallthru
          _
        // Predicated region
        $region25: #{tpu_custom_call.1} parent=11 // pred_check
          %p191 = pneg %p141
        $region26: #{tpu_custom_call.1} parent=11 // pred_check_branch
          %193 = sbr.rel (%p191) target = $region28
        $region27: #{tpu_custom_call.1} parent=11 // pred_region
          _
        $region28: #{tpu_custom_call.1} parent=11 // pred_fallthru
          _
      $region12: #{tpu_custom_call.1} parent=5 // pred_fallthru
        _
      %p194 = scmp.lt.s32.totalorder %s17, 2
      // Predicated region
      $region29: #{tpu_custom_call.1} parent=5 // pred_check
        %p195 = pneg %p194
      $region30: #{tpu_custom_call.1} parent=5 // pred_check_branch
        %197 = sbr.rel (%p195) target = $region32
      $region31: #{tpu_custom_call.1} parent=5 // pred_region
        // Predicated region
        $region33: #{tpu_custom_call.1} parent=31 // pred_check
          %p198 = pneg %p51
        $region34: #{tpu_custom_call.1} parent=31 // pred_check_branch
          %200 = sbr.rel (%p198) target = $region36
        $region35: #{tpu_custom_call.1} parent=31 // pred_region
          %s201 = sand.u32 %s41, 1
          %s202 = scalar_lea.sflag [#allocation4], %s201
          %s203 = sand.u32 %s41, 1
          %s204 = smul.addr %s203, 64
          %s205 = scalar_lea.vmem [#allocation3], %s204
          %s206 = smul.u32 2, %s25
          %s208 = ssub.s32 1024, 1024
          %209 = vsyncadd %s202, %s208
          %s210 = smul.addr %s24, 8
          %s211 = sadd.s32 %s206, %s210
          %s212 = smul.addr %s211, 128
          %s213 = scalar_lea.hbm %s0, %s212
          %s214 = sshll.u32 %s205, 4
          %s215 = int_to_ptr.vmem [resolvable:$true] %s214
          %220 = dma.hbm_to_vmem [thread:$0]  %s213, 1024, %s215, %s202, 256, 256, 16
        $region36: #{tpu_custom_call.1} parent=31 // pred_fallthru
          _
      $region32: #{tpu_custom_call.1} parent=5 // pred_fallthru
        _
      %p221 = scmp.le.s32.totalorder 1, %s17
      %p222 = scmp.lt.s32.totalorder %s17, 3
      %p223 = pnand %p221, %p222
      %p224 = pneg %p223
      // Predicated region
      $region37: #{tpu_custom_call.1} parent=5 // pred_check
        _
      $region38: #{tpu_custom_call.1} parent=5 // pred_check_branch
        %226 = sbr.rel (%p223) target = $region40
      $region39: #{tpu_custom_call.1} parent=5 // pred_region
        %s227 = ssub.s32 %s17, 1
        %s228 = sand.u32 %s44, 1
        %s229 = scalar_lea.sflag [#allocation4], %s228
        %s230 = sand.u32 %s44, 1
        %s231 = smul.addr %s230, 64
        %s232 = scalar_lea.vmem [#allocation3], %s231
        // Predicated region
        $region41: #{tpu_custom_call.1} parent=39 // pred_check
          %p233 = pneg %p57
        $region42: #{tpu_custom_call.1} parent=39 // pred_check_branch
          %235 = sbr.rel (%p233) target = $region44
        $region43: #{tpu_custom_call.1} parent=39 // pred_region
          %236 = dma.done %s229, 1024
        $region44: #{tpu_custom_call.1} parent=39 // pred_fallthru
          _
        %s237 = sand.u32 %s44, 1
        %s238 = scalar_lea.sflag [#allocation4], %s237
        %s239 = sand.u32 %s44, 1
        %s240 = smul.addr %s239, 64
        %s241 = scalar_lea.vmem [#allocation3], %s240
        %p242 = pneg %p57
        %p243 = pneg %p54
        %p244 = pneg %p78
        %p245 = pneg %p75
        %p246 = pneg %p99
        %p247 = pneg %p96
        %p248 = pneg %p120
        %p249 = pneg %p117
        %p250 = pneg %p141
        %p251 = pneg %p138
        %p252 = pneg %p167
        %p253 = pneg %p164
        %s254 = sand.u32 %s154, 1
        %s255 = scalar_lea.sflag [#allocation5], %s254
        %s256 = sand.u32 %s154, 1
        %s257 = scalar_lea.vmem [#allocation6], %s256
        %s258 = smul.u32 2, %s27
        %p259 = scmp.eq.s32.totalorder %s27, 0
        // Predicated region
        $region45: #{tpu_custom_call.1} parent=39 // pred_check
          %p260 = pneg %p259
        $region46: #{tpu_custom_call.1} parent=39 // pred_check_branch
          %262 = sbr.rel (%p260) target = $region48
        $region47: #{tpu_custom_call.1} parent=39 // pred_region
          %263 = vst [vmem:[#allocation2] sm:$0xff] 0.0
          %264 = vst [vmem:[#allocation2 + $0x8] sm:$0xff] 0.0
          %265 = vst [vmem:[#allocation2 + $0x10] sm:$0xff] 0.0
          %266 = vst [vmem:[#allocation2 + $0x18] sm:$0xff] 0.0
        $region48: #{tpu_custom_call.1} parent=39 // pred_fallthru
          _
        %v267 = vld [vmem:[%s232] sm:$0xff]
        %v268 = vld [vmem:[%s232 + $0x8] sm:$0xff]
        %v269 = vld [vmem:[%s232 + $0x10] sm:$0xff]
        %v270 = vld [vmem:[%s232 + $0x18] sm:$0xff]
        %v271 = vld [vmem:[%s232 + $0x20] sm:$0xff]
        %v272 = vld [vmem:[%s232 + $0x28] sm:$0xff]
        %v273 = vld [vmem:[%s232 + $0x30] sm:$0xff]
        %v274 = vld [vmem:[%s232 + $0x38] sm:$0xff]
        %v275 = vadd.f32 %v267, %v268
        %v276 = vadd.f32 %v269, %v270
        %v277 = vadd.f32 %v271, %v272
        %v278 = vadd.f32 %v273, %v274
        %v279 = vld [vmem:[#allocation2] sm:$0xff]
        %v280 = vld [vmem:[#allocation2 + $0x8] sm:$0xff]
        %v281 = vld [vmem:[#allocation2 + $0x10] sm:$0xff]
        %v282 = vld [vmem:[#allocation2 + $0x18] sm:$0xff]
        %v283 = vadd.f32 %v279, %v275
        %v284 = vadd.f32 %v280, %v276
        %v285 = vadd.f32 %v281, %v277
        %v286 = vadd.f32 %v282, %v278
        %287 = vst [vmem:[#allocation2] sm:$0xff] %v283
        %288 = vst [vmem:[#allocation2 + $0x8] sm:$0xff] %v284
        %289 = vst [vmem:[#allocation2 + $0x10] sm:$0xff] %v285
        %290 = vst [vmem:[#allocation2 + $0x18] sm:$0xff] %v286
        // Predicated region
        $region49: #{tpu_custom_call.1} parent=39 // pred_check
          %p291 = pneg %p259
        $region50: #{tpu_custom_call.1} parent=39 // pred_check_branch
          %293 = sbr.rel (%p291) target = $region52
        $region51: #{tpu_custom_call.1} parent=39 // pred_region
          %v294 = vld [vmem:[#allocation2] sm:$0xff]
          %v295 = vld [vmem:[#allocation2 + $0x8] sm:$0xff]
          %v296 = vld [vmem:[#allocation2 + $0x10] sm:$0xff]
          %v297 = vld [vmem:[#allocation2 + $0x18] sm:$0xff]
          %298 = vadd.xlane.f32.xlu0 %v294
          %v299 = vpop.xlane.xlu0 %298
          %300 = vadd.xlane.f32.xlu0 %v295
          %v301 = vpop.xlane.xlu0 %300
          %302 = vadd.xlane.f32.xlu0 %v296
          %v303 = vpop.xlane.xlu0 %302
          %304 = vadd.xlane.f32.xlu0 %v297
          %v305 = vpop.xlane.xlu0 %304
          %v306 = vld [vmem:[%s1] sm:$0xff]
          %v307 = vld [vmem:[%s1 + $0x8] sm:$0xff]
          %v308 = vld [vmem:[%s1 + $0x10] sm:$0xff]
          %v309 = vld [vmem:[%s1 + $0x18] sm:$0xff]
          %v310 = vld [vmem:[%s2] sm:$0x1]
          %v315 = vlaneseq
          %v316 = vand.u32 %v315, 127
          %v317 = vlaneseq
          %v318 = vshrl.u32 %v317, 7
          %v319 = vsub.s32 %v316, %v318
          %v320 = vrot.slane %v299, %v319
          %v321 = vadd.s32 %v316, 4294967288
          %v322 = vlaneseq
          %v323 = vshrl.u32 %v322, 7
          %v324 = vsub.s32 %v321, %v323
          %v325 = vrot.slane %v301, %v324
          %vm326 = vcmask 130112
          %v327 = vsel %vm326, %v325, %v320
          %v328 = vadd.s32 %v316, 4294967280
          %v329 = vlaneseq
          %v330 = vshrl.u32 %v329, 7
          %v331 = vsub.s32 %v328, %v330
          %v332 = vrot.slane %v303, %v331
          %vm333 = vcmask 195712
          %v334 = vsel %vm333, %v332, %v327
          %v335 = vadd.s32 %v316, 4294967272
          %v336 = vlaneseq
          %v337 = vshrl.u32 %v336, 7
          %v338 = vsub.s32 %v335, %v337
          %v339 = vrot.slane %v305, %v338
          %vm340 = vcmask 261312
          %v341 = vsel %vm340, %v339, %v334
          %vm342 = vcmask 261120
          %v343 = vsel %vm342, %v341, 0
          %345 = vmatprep.subr.mxu0 0.0
          %346 = vmatpush1.msra.mxu0 %v306
          %347 = vmatprep.subr.mxu0 0.0
          %348 = vmatpush1.msra.mxu0 %v307
          %349 = vmatprep.subr.mxu0 0.0
          %350 = vmatpush1.msra.mxu0 %v308
          %351 = vmatprep.subr.mxu0 0.0
          %352 = vmatpush1.msra.mxu0 %v309
          %353 = vmatprep.subr.mxu0 0.0
          %354 = vmatpush1.msra.mxu0 0.0
          %355 = vmatprep.subr.mxu0 0.0
          %356 = vmatpush1.msra.mxu0 0.0
          %357 = vmatprep.subr.mxu0 0.0
          %358 = vmatpush1.msra.mxu0 0.0
          %359 = vmatprep.subr.mxu0 0.0
          %360 = vmatpush1.msra.mxu0 0.0
          %361 = vmatprep.subr.mxu0 0.0
          %362 = vmatpush1.msra.mxu0 0.0
          %363 = vmatprep.subr.mxu0 0.0
          %364 = vmatpush1.msra.mxu0 0.0
          %365 = vmatprep.subr.mxu0 0.0
          %366 = vmatpush1.msra.mxu0 0.0
          %367 = vmatprep.subr.mxu0 0.0
          %368 = vmatpush1.msra.mxu0 0.0
          %369 = vmatprep.subr.mxu0 0.0
          %370 = vmatpush1.msra.mxu0 0.0
          %371 = vmatprep.subr.mxu0 0.0
          %372 = vmatpush1.msra.mxu0 0.0
          %373 = vmatprep.subr.mxu0 0.0
          %374 = vmatpush1.msra.mxu0 0.0
          %375 = vmatprep.subr.mxu0 0.0
          %376 = vmatpush1.msra.mxu0 0.0
          %377 = vmatprep.subr.mxu0 0.0
          %378 = vmatpush1.msra.mxu0 0.0
          %379 = vmatprep.subr.mxu0 0.0
          %380 = vmatpush1.msra.mxu0 0.0
          %381 = vmatprep.subr.mxu0 0.0
          %382 = vmatpush1.msra.mxu0 0.0
          %383 = vmatprep.subr.mxu0 0.0
          %384 = vmatpush1.msra.mxu0 0.0
          %385 = vmatprep.subr.mxu0 0.0
          %386 = vmatpush1.msra.mxu0 0.0
          %387 = vmatprep.subr.mxu0 0.0
          %388 = vmatpush1.msra.mxu0 0.0
          %389 = vmatprep.subr.mxu0 0.0
          %390 = vmatpush1.msra.mxu0 0.0
          %391 = vmatprep.subr.mxu0 0.0
          %392 = vmatpush1.msra.mxu0 0.0
          %393 = vmatprep.subr.mxu0 0.0
          %394 = vmatpush1.msra.mxu0 0.0
          %395 = vmatprep.subr.mxu0 0.0
          %396 = vmatpush1.msra.mxu0 0.0
          %397 = vmatprep.subr.mxu0 0.0
          %398 = vmatpush1.msra.mxu0 0.0
          %399 = vmatprep.subr.mxu0 0.0
          %400 = vmatpush1.msra.mxu0 0.0
          %401 = vmatprep.subr.mxu0 0.0
          %402 = vmatpush1.msra.mxu0 0.0
          %403 = vmatprep.subr.mxu0 0.0
          %404 = vmatpush1.msra.mxu0 0.0
          %405 = vmatprep.subr.mxu0 0.0
          %406 = vmatpush1.msra.mxu0 0.0
          %407 = vmatprep.subr.mxu0 0.0
          %408 = vmatpush1.msra.mxu0 0.0
          %409 = vmatprep.mubr.f32.mxu0 0.0
          %410 = vmatmul.mubr.f32.gmra.mrb[0].mxu0 %v343
          %v411 = vpop.f32.mrb[0].mxu0
          %v412 = vadd.f32 %v310, %v411
          %v413 = vpop.f32.mrb[0].mxu0
          %414 = vdwg.mxu0
          %v415 = vmax.f32 %v412, 0.0
          %v416 = vld [vmem:[%s3] sm:$0xf]
          %v417 = vld [vmem:[%s4] sm:$0x1]
          %vm418 = vcmask 31744
          %v420 = vsel %vm418, %v415, 0
          %vm422 = vcmask 1043456
          %v424 = vsel %vm422, %v416, 0
          %426 = vmatprep.subr.mxu0 0.0
          %427 = vmatpush1.msra.mxu0 %v424
          %428 = vmatprep.subr.mxu0 0.0
          %429 = vmatpush1.msra.mxu0 0.0
          %430 = vmatprep.subr.mxu0 0.0
          %431 = vmatpush1.msra.mxu0 0.0
          %432 = vmatprep.subr.mxu0 0.0
          %433 = vmatpush1.msra.mxu0 0.0
          %434 = vmatprep.subr.mxu0 0.0
          %435 = vmatpush1.msra.mxu0 0.0
          %436 = vmatprep.subr.mxu0 0.0
          %437 = vmatpush1.msra.mxu0 0.0
          %438 = vmatprep.subr.mxu0 0.0
          %439 = vmatpush1.msra.mxu0 0.0
          %440 = vmatprep.subr.mxu0 0.0
          %441 = vmatpush1.msra.mxu0 0.0
          %442 = vmatprep.subr.mxu0 0.0
          %443 = vmatpush1.msra.mxu0 0.0
          %444 = vmatprep.subr.mxu0 0.0
          %445 = vmatpush1.msra.mxu0 0.0
          %446 = vmatprep.subr.mxu0 0.0
          %447 = vmatpush1.msra.mxu0 0.0
          %448 = vmatprep.subr.mxu0 0.0
          %449 = vmatpush1.msra.mxu0 0.0
          %450 = vmatprep.subr.mxu0 0.0
          %451 = vmatpush1.msra.mxu0 0.0
          %452 = vmatprep.subr.mxu0 0.0
          %453 = vmatpush1.msra.mxu0 0.0
          %454 = vmatprep.subr.mxu0 0.0
          %455 = vmatpush1.msra.mxu0 0.0
          %456 = vmatprep.subr.mxu0 0.0
          %457 = vmatpush1.msra.mxu0 0.0
          %458 = vmatprep.subr.mxu0 0.0
          %459 = vmatpush1.msra.mxu0 0.0
          %460 = vmatprep.subr.mxu0 0.0
          %461 = vmatpush1.msra.mxu0 0.0
          %462 = vmatprep.subr.mxu0 0.0
          %463 = vmatpush1.msra.mxu0 0.0
          %464 = vmatprep.subr.mxu0 0.0
          %465 = vmatpush1.msra.mxu0 0.0
          %466 = vmatprep.subr.mxu0 0.0
          %467 = vmatpush1.msra.mxu0 0.0
          %468 = vmatprep.subr.mxu0 0.0
          %469 = vmatpush1.msra.mxu0 0.0
          %470 = vmatprep.subr.mxu0 0.0
          %471 = vmatpush1.msra.mxu0 0.0
          %472 = vmatprep.subr.mxu0 0.0
          %473 = vmatpush1.msra.mxu0 0.0
          %474 = vmatprep.subr.mxu0 0.0
          %475 = vmatpush1.msra.mxu0 0.0
          %476 = vmatprep.subr.mxu0 0.0
          %477 = vmatpush1.msra.mxu0 0.0
          %478 = vmatprep.subr.mxu0 0.0
          %479 = vmatpush1.msra.mxu0 0.0
          %480 = vmatprep.subr.mxu0 0.0
          %481 = vmatpush1.msra.mxu0 0.0
          %482 = vmatprep.subr.mxu0 0.0
          %483 = vmatpush1.msra.mxu0 0.0
          %484 = vmatprep.subr.mxu0 0.0
          %485 = vmatpush1.msra.mxu0 0.0
          %486 = vmatprep.subr.mxu0 0.0
          %487 = vmatpush1.msra.mxu0 0.0
          %488 = vmatprep.subr.mxu0 0.0
          %489 = vmatpush1.msra.mxu0 0.0
          %490 = vmatprep.mubr.f32.mxu0 0.0
          %491 = vmatmul.mubr.f32.gmra.mrb[0].mxu0 %v420
          %v492 = vpop.f32.mrb[0].mxu0
          %v493 = vadd.f32 %v417, %v492
          %v494 = vpop.f32.mrb[0].mxu0
          %495 = vdwg.mxu0
          %v496 = vadd.f32 %v493, 3.0
          %v497 = vmax.f32 %v496, 0.0
          %v498 = vmin.f32 %v497, 6.0
          %v499 = vmul.f32 %v498, 0.16666667
          %500 = vst [vmem:[%s257] sm:$0x1] %v499
        $region52: #{tpu_custom_call.1} parent=39 // pred_fallthru
          _
        %s501 = sand.u32 %s154, 1
        %s502 = scalar_lea.sflag [#allocation5], %s501
        %s503 = sand.u32 %s154, 1
        %s504 = scalar_lea.vmem [#allocation6], %s503
        // Predicated region
        $region53: #{tpu_custom_call.1} parent=39 // pred_check
          %p505 = pneg %p164
        $region54: #{tpu_custom_call.1} parent=39 // pred_check_branch
          %507 = sbr.rel (%p505) target = $region56
        $region55: #{tpu_custom_call.1} parent=39 // pred_region
          %s509 = ssub.s32 16, 16
          %510 = vsyncadd %s502, %s509
          %s511 = smul.addr %s26, 16
          %s512 = scalar_lea.hbm %s5, %s511
          %s514 = sshll.u32 %s504, 4
          %s515 = int_to_ptr.vmem [resolvable:$true] %s514
          %517 = dma.vmem_to_hbm [thread:$0]  %s515, 16, %s512, %s502
        $region56: #{tpu_custom_call.1} parent=39 // pred_fallthru
          _
      $region40: #{tpu_custom_call.1} parent=5 // pred_fallthru
        _
      %p518 = scmp.le.s32.totalorder 2, %s17
      // Predicated region
      $region57: #{tpu_custom_call.1} parent=5 // pred_check
        %p519 = pneg %p518
      $region58: #{tpu_custom_call.1} parent=5 // pred_check_branch
        %521 = sbr.rel (%p519) target = $region60
      $region59: #{tpu_custom_call.1} parent=5 // pred_region
        %s522 = ssub.s32 %s17, 2
        // Predicated region
        $region61: #{tpu_custom_call.1} parent=59 // pred_check
          %p523 = pneg %p170
        $region62: #{tpu_custom_call.1} parent=59 // pred_check_branch
          %525 = sbr.rel (%p523) target = $region64
        $region63: #{tpu_custom_call.1} parent=59 // pred_region
          %s526 = sand.u32 %s155, 1
          %s527 = scalar_lea.sflag [#allocation5], %s526
          %s528 = sand.u32 %s155, 1
          %s529 = scalar_lea.vmem [#allocation6], %s528
          %530 = dma.done %s527, 16
        $region64: #{tpu_custom_call.1} parent=59 // pred_fallthru
          _
      $region60: #{tpu_custom_call.1} parent=5 // pred_fallthru
        _
    $region6: #{tpu_custom_call.1} parent=1 // loop_footer
      %s21 = sadd.s32 1, %s17
    $region7: #{tpu_custom_call.1} parent=1 // loop_footer_branch
      %16 = sbr.rel target = $region3
    $region8: #{tpu_custom_call.1} parent=1 // loop_exit
      _
    %531 = vsyncpa [#allocation4], 1
    %s532 = scalar_lea.sflag [#allocation4], 1
    %533 = vsyncpa %s532, 1
    %534 = vsyncpa [#allocation5], 1
    %s535 = scalar_lea.sflag [#allocation5], 1
    %536 = vsyncpa %s535, 1

</llo_original>
